<compile_context>
chip_gen: v7x
topology: tpu7x:2x2x1
jax: 0.10.0
libtpu: 0.0.40
codegen_flags: <defaults>
</compile_context>

<pallas_src>
import jax
import jax.numpy as jnp
from jax.experimental import pallas as pl
from jax.experimental.pallas import tpu as pltpu


def _forward_kernel(x_ref, y_ref, ld_ref):
    x = x_ref[...].astype(jnp.float32)
    log_x = jnp.log(x)                                      # (TB, D)
    s = jnp.sum(x, axis=-1, keepdims=True)                  # (TB, 1)
    log_1ms = jnp.log(1.0 - s)                              # (TB, 1)
    y_ref[...] = (log_x - log_1ms).astype(y_ref.dtype)
    # 1 + s/(1-s) == 1/(1-s)  =>  log(...) == -log(1-s); reuse log_1ms and
    # drop one EUP log + one divide per row.
    ld = -jnp.sum(log_x, axis=-1, keepdims=True) - log_1ms
    ld_ref[...] = ld.astype(ld_ref.dtype)


def _reverse_kernel(x_ref, y_ref, ld_ref):
    x = x_ref[...].astype(jnp.float32)
    log_x = jnp.log(x)                                      # (TB, D)
    s = jnp.sum(x, axis=-1, keepdims=True)                  # (TB, 1)
    ld = jnp.sum(log_x, axis=-1, keepdims=True) + jnp.log(1.0 - s)
    ld_ref[...] = ld.astype(ld_ref.dtype)
    ex = jnp.exp(x)
    denom = jnp.sum(ex, axis=-1, keepdims=True) + 1.0
    # EUP approximate reciprocal + one Newton-Raphson step (keeps ~1e-7 rel
    # error, well inside 1e-5 tolerance) instead of an exact divide sequence.
    r = pl.reciprocal(denom, approx=True)
    r = r * (2.0 - denom * r)
    y_ref[...] = (ex * r).astype(y_ref.dtype)


def _round_up(n, m):
    return ((n + m - 1) // m) * m


def simplex_mirror_map(x, reverse=False):
    """Pallas TPU implementation of SimplexMirrorMap.forward.

    x: (B, D) float array. Returns (y, ld) with y (B, D) in x.dtype and
    ld (B,) in float32 (computed in f32 inside the kernel).
    """
    B, D = x.shape

    # --- tile sizing (batch rows per block) --------------------------------
    # Double-buffered x-in + y-out tiles ~= 4 * TB * D * 4 bytes (f32 math).
    # Budget 16 MiB for those so the kernel fits the default scoped VMEM on
    # v5e (16 MiB) and comfortably inside v7x's 64 MiB physical VMEM.
    bytes_per_row = 4 * D
    tile_budget_bytes = 16 * 1024 * 1024
    tb_cap = max(8, (tile_budget_bytes // (4 * bytes_per_row)) // 8 * 8)
    TB = min(1024, tb_cap, _round_up(B, 8))

    # Pad the batch axis to a multiple of TB (padding rows are benign and
    # sliced off below).
    B_pad = _round_up(B, TB)
    if B_pad != B:
        x_in = jnp.pad(x, ((0, B_pad - B), (0, 0)), constant_values=0.5 / D)
    else:
        x_in = x
    num_blocks = B_pad // TB

    kernel = _reverse_kernel if reverse else _forward_kernel

    y, ld = pl.pallas_call(
        kernel,
        out_shape=(
            jax.ShapeDtypeStruct((B_pad, D), x.dtype),
            jax.ShapeDtypeStruct((B_pad, 1), jnp.float32),
        ),
        grid_spec=pltpu.PrefetchScalarGridSpec(
            num_scalar_prefetch=0,
            grid=(num_blocks,),
            in_specs=[pl.BlockSpec((TB, D), lambda i: (i, 0))],
            out_specs=[
                pl.BlockSpec((TB, D), lambda i: (i, 0)),
                # TODO(synk): ld stays (TB, 1) (lane-sparse store); a lane-dense
                # (1, TB) layout needs a sublane->lane relayout that isn't worth
                # the lowering risk since y dominates the writeback traffic.
                pl.BlockSpec((TB, 1), lambda i: (i, 0)),
            ],
        ),
        compiler_params=pltpu.CompilerParams(
            dimension_semantics=("parallel",),
            vmem_limit_bytes=48 * 1024 * 1024,
        ),
    )(x_in)

    return y[:B], ld[:B, 0]


def _reference_forward(x, reverse=False):
    # Pure-JAX reference mirroring the PyTorch module exactly.
    if reverse:
        ld = jnp.log(x).sum(-1) + jnp.log(1.0 - x.sum(-1))
        y = jnp.exp(x) / (jnp.exp(x).sum(-1, keepdims=True) + 1.0)
        return y, ld
    else:
        ld = -jnp.log(x).sum(-1) + jnp.log(1.0 + x.sum(-1) / (1.0 - x.sum(-1)))
        y = jnp.log(x) - jnp.log(1.0 - x.sum(-1, keepdims=True))
        return y, ld


if __name__ == "__main__":
    key = jax.random.PRNGKey(0)
    B, D = 8, 16
    # Points strictly inside the open simplex: x > 0 and sum(x, -1) < 1.
    raw = jax.random.uniform(key, (B, D), dtype=jnp.float32, minval=0.1, maxval=1.0)
    x = 0.5 * raw / jnp.sum(raw, axis=-1, keepdims=True)  # rows sum to 0.5 < 1

    y, ld = simplex_mirror_map(x, reverse=False)
    jax.block_until_ready((y, ld))
    y_ref, ld_ref = _reference_forward(x, reverse=False)
    assert jnp.allclose(y, y_ref, atol=1e-5, rtol=1e-5)
    assert jnp.allclose(ld, ld_ref, atol=1e-5, rtol=1e-5)

    # Exercise the reverse branch once.
    x_rev = 0.3 * raw / jnp.sum(raw, axis=-1, keepdims=True)
    y2, ld2 = simplex_mirror_map(x_rev, reverse=True)
    jax.block_until_ready((y2, ld2))
    y2_ref, ld2_ref = _reference_forward(x_rev, reverse=True)
    assert jnp.allclose(y2, y2_ref, atol=1e-5, rtol=1e-5)
    assert jnp.allclose(ld2, ld2_ref, atol=1e-5, rtol=1e-5)

    # Also hit the multi-block / padded path once (B not a multiple of the tile).
    key2 = jax.random.PRNGKey(1)
    raw3 = jax.random.uniform(key2, (1030, 256), dtype=jnp.float32, minval=0.1, maxval=1.0)
    x3 = 0.5 * raw3 / jnp.sum(raw3, axis=-1, keepdims=True)
    y3, ld3 = simplex_mirror_map(x3, reverse=False)
    jax.block_until_ready((y3, ld3))
    y3_ref, ld3_ref = _reference_forward(x3, reverse=False)
    assert jnp.allclose(y3, y3_ref, atol=1e-5, rtol=1e-5)
    assert jnp.allclose(ld3, ld3_ref, atol=1e-5, rtol=1e-5)

    print("KERNEL_OK")
</pallas_src>

<mosaic_0001>
module attributes {stable_mosaic.version = 11 : i64} {
  func.func @_forward_kernel(%arg0: i32, %arg1: memref<8x16xf32, #tpu.memory_space<vmem>>, %arg2: memref<8x16xf32, #tpu.memory_space<vmem>>, %arg3: memref<8x1xf32, #tpu.memory_space<vmem>>) attributes {dimension_semantics = [#tpu.dimension_semantics<parallel>], iteration_bounds = array<i64: 1>, scalar_prefetch = 0 : i64, scratch_operands = 0 : i64, tpu.core_type = #tpu.core_type<tc>, window_params = [{transform_indices = @transform_0, window_bounds = array<i64: 8, 16>}, {transform_indices = @transform_1, window_bounds = array<i64: 8, 16>}, {transform_indices = @transform_2, window_bounds = array<i64: 8, 1>}]} {
    %c0 = arith.constant 0 : index
    %c0_0 = arith.constant 0 : index
    %0 = vector.load %arg1[%c0, %c0_0] : memref<8x16xf32, #tpu.memory_space<vmem>>, vector<8x16xf32>
    %1 = math.log %0 : vector<8x16xf32>
    %cst = arith.constant dense<0.000000e+00> : vector<8xf32>
    %2 = vector.multi_reduction <add>, %0, %cst [1] : vector<8x16xf32> to vector<8xf32>
    %3 = vector.shape_cast %2 : vector<8xf32> to vector<8x1xf32>
    %cst_1 = arith.constant 1.000000e+00 : f32
    %4 = vector.broadcast %cst_1 : f32 to vector<8x1xf32>
    %5 = arith.subf %4, %3 : vector<8x1xf32>
    %6 = math.log %5 : vector<8x1xf32>
    %7 = vector.broadcast %6 : vector<8x1xf32> to vector<8x16xf32>
    %8 = arith.subf %1, %7 : vector<8x16xf32>
    %c0_2 = arith.constant 0 : index
    %c0_3 = arith.constant 0 : index
    %9 = vector.load %arg2[%c0_2, %c0_3] : memref<8x16xf32, #tpu.memory_space<vmem>>, vector<8x16xf32>
    tpu.vector_store %arg2[%c0_2, %c0_3], %8 {strides = array<i32>} : memref<8x16xf32, #tpu.memory_space<vmem>>, vector<8x16xf32>,
    %cst_4 = arith.constant dense<0.000000e+00> : vector<8xf32>
    %10 = vector.multi_reduction <add>, %1, %cst_4 [1] : vector<8x16xf32> to vector<8xf32>
    %11 = vector.shape_cast %10 : vector<8xf32> to vector<8x1xf32>
    %cst_5 = arith.constant 0.000000e+00 : f32
    %12 = vector.broadcast %cst_5 : f32 to vector<8x1xf32>
    %13 = arith.subf %12, %11 : vector<8x1xf32>
    %14 = arith.subf %13, %6 : vector<8x1xf32>
    %c0_6 = arith.constant 0 : index
    %c0_7 = arith.constant 0 : index
    %15 = vector.load %arg3[%c0_6, %c0_7] : memref<8x1xf32, #tpu.memory_space<vmem>>, vector<8x1xf32>
    tpu.vector_store %arg3[%c0_6, %c0_7], %14 {strides = array<i32>} : memref<8x1xf32, #tpu.memory_space<vmem>>, vector<8x1xf32>,
    return
  }
  func.func @transform_0(%arg0: i32) -> (i32, i32) {
    %c0_i32 = arith.constant 0 : i32
    %c0_i32_0 = arith.constant 0 : i32
    return %arg0, %c0_i32 : i32, i32
  }
  func.func @transform_1(%arg0: i32) -> (i32, i32) {
    %c0_i32 = arith.constant 0 : i32
    %c0_i32_0 = arith.constant 0 : i32
    return %arg0, %c0_i32 : i32, i32
  }
  func.func @transform_2(%arg0: i32) -> (i32, i32) {
    %c0_i32 = arith.constant 0 : i32
    %c0_i32_0 = arith.constant 0 : i32
    return %arg0, %c0_i32 : i32, i32
  }
}

</mosaic_0001>

<llo_original>
// kernel: tpu_custom_call.1
$region0: #{tpu_custom_call.1}
  #allocation0 [shape = 'u32[]', space=smem, size = 0x4, offset = 0x4, fixed_abs, tag = 'smem constant byte address 0x4 - core index']
  #allocation1 [shape = 'u32[144,128]{1,0:T(1,128)}', space=vmem, size = 0x12000, scoped, tag = 'internal scratch']
  %s0 = inlined_call_operand.hbm [shape: f32[8,16], index: 0, kind: input, shape index: {}]
  %s1 = inlined_call_operand.hbm [shape: f32[8,16], index: 1, kind: output, shape index: {0}]
  %s2 = inlined_call_operand.vmem [shape: f32[8,1], index: 2, kind: output, shape index: {1}]
  %3 = xla_tuple %s1, %s2
  %s4 = sld [smem:[#allocation0]]
  $region26: #{tpu_custom_call.1} parent=0
    _
  %s6 = ssub.s32 1, %s4
  %s7 = scalar_select 0, %s6, %s4
  $region1: #{tpu_custom_call.1} parent=0
    #allocation2 [shape = 'u8[4096]{0}', space=vmem, size = 0x1000, scoped, tag = 'input window, operand 0, single buffered']
    #allocation3 [shape = 's32[1]{0}', space=sflag, size = 0x4, scoped, tag = 'scoped memory for tpu_custom_call.1']
    #allocation4 [shape = 's32[1]{0}', space=sflag, size = 0x4, scoped, tag = 'scoped memory for tpu_custom_call.1']
    #allocation5 [shape = 'u8[4096]{0}', space=vmem, size = 0x1000, scoped, tag = 'output window, operand 0, single buffered']
    %8 = vsyncpa [#allocation3], 0
    %9 = vsyncpa [#allocation4], 0
    // Predicated region
    $region2: #{tpu_custom_call.1} parent=1 // pred_check
      _
    $region3: #{tpu_custom_call.1} parent=1 // pred_check_branch
      %11 = sbr.rel (0) target = $region5
    $region4: #{tpu_custom_call.1} parent=1 // pred_region
      %s13 = ssub.s32 128, 128
      %14 = vsyncadd [#allocation3], %s13
      %s16 = sshll.u32 [#allocation2], 4
      %s17 = int_to_ptr.vmem [resolvable:$true] %s16
      %19 = dma.hbm_to_vmem [thread:$0]  %s0, 128, %s17, [#allocation3]
    $region5: #{tpu_custom_call.1} parent=1 // pred_fallthru
      _
    // Predicated region
    $region6: #{tpu_custom_call.1} parent=1 // pred_check
      _
    $region7: #{tpu_custom_call.1} parent=1 // pred_check_branch
      %21 = sbr.rel (0) target = $region9
    $region8: #{tpu_custom_call.1} parent=1 // pred_region
      %22 = dma.done [#allocation3], 128
    $region9: #{tpu_custom_call.1} parent=1 // pred_fallthru
      _
    %v23 = vld [vmem:[#allocation2] sm:$0xff]
    %v24 = vlog2.pop %v23
    %v25 = vmul.f32 %v24, 0.6931472
    %vm26 = vcmask 130048
    %v27 = vsel %vm26, %v23, 0.0
    %28 = vadd.xlane.f32.xlu0 %v27
    %v29 = vpop.xlane.xlu0 %28
    %v30 = vsub.f32 1.0, %v29
    %v31 = vlog2.pop %v30
    %v32 = vmul.f32 %v31, 0.6931472
    %v33 = vsub.f32 %v25, %v32
    %34 = vst.msk [vmem:[#allocation5] sm:$0xff] %vm26, %v33
    %v35 = vsel %vm26, %v25, 0.0
    %36 = vadd.xlane.f32.xlu0 %v35
    %v37 = vpop.xlane.xlu0 %36
    %v38 = vsub.f32 0.0, %v37
    %v39 = vsub.f32 %v38, %v32
    %vm40 = vcmask 7168
    %41 = vst.msk [vmem:[%s2] sm:$0xff] %vm40, %v39
    // Predicated region
    $region10: #{tpu_custom_call.1} parent=1 // pred_check
      _
    $region11: #{tpu_custom_call.1} parent=1 // pred_check_branch
      %43 = sbr.rel (0) target = $region13
    $region12: #{tpu_custom_call.1} parent=1 // pred_region
      %s45 = ssub.s32 128, 128
      %46 = vsyncadd [#allocation4], %s45
      %s48 = sshll.u32 [#allocation5], 4
      %s49 = int_to_ptr.vmem [resolvable:$true] %s48
      %51 = dma.vmem_to_hbm [thread:$0]  %s49, 128, %s1, [#allocation4]
    $region13: #{tpu_custom_call.1} parent=1 // pred_fallthru
      _
    // Predicated region
    $region14: #{tpu_custom_call.1} parent=1 // pred_check
      _
    $region15: #{tpu_custom_call.1} parent=1 // pred_check_branch
      %53 = sbr.rel (0) target = $region17
    $region16: #{tpu_custom_call.1} parent=1 // pred_region
      _
    $region17: #{tpu_custom_call.1} parent=1 // pred_fallthru
      _
    // Predicated region
    $region18: #{tpu_custom_call.1} parent=1 // pred_check
      _
    $region19: #{tpu_custom_call.1} parent=1 // pred_check_branch
      %55 = sbr.rel (0) target = $region21
    $region20: #{tpu_custom_call.1} parent=1 // pred_region
      %56 = dma.done [#allocation4], 128
    $region21: #{tpu_custom_call.1} parent=1 // pred_fallthru
      _
    // Predicated region
    $region22: #{tpu_custom_call.1} parent=1 // pred_check
      _
    $region23: #{tpu_custom_call.1} parent=1 // pred_check_branch
      %58 = sbr.rel (0) target = $region25
    $region24: #{tpu_custom_call.1} parent=1 // pred_region
      _
    $region25: #{tpu_custom_call.1} parent=1 // pred_fallthru
      _
    %59 = vsyncpa [#allocation3], 1
    %60 = vsyncpa [#allocation4], 1

</llo_original>
